<compile_context>
chip_gen: v7x
topology: tpu7x:2x2x1
jax: 0.10.0
libtpu: 0.0.40
codegen_flags: <defaults>
</compile_context>

<pallas_src>
import functools

import jax
import jax.numpy as jnp
from jax import lax
from jax.experimental import pallas as pl
from jax.experimental.pallas import tpu as pltpu

_ROW_ALIGN = 16  # works for f32 (8) and packed bf16 (16) sublane tiling


def _round_up(v, m):
    return (v + m - 1) // m * m


def _choose_block_rows(n, c, itemsize, n_streams, block_rows):
    # Keep each pipelined input buffer around <= 2 MiB so 2-deep buffering of
    # all streams fits comfortably in scoped VMEM on v5e / v6e / v7x.
    budget = 2 * 1024 * 1024
    rows_by_vmem = max(_ROW_ALIGN, budget // max(1, c * itemsize * n_streams))
    tn = min(block_rows, rows_by_vmem, _round_up(n, _ROW_ALIGN))
    tn = max(_ROW_ALIGN, (tn // _ROW_ALIGN) * _ROW_ALIGN)
    return tn


def _row_mask(block_rows, n_valid):
    base = pl.program_id(0) * block_rows
    rows = lax.broadcasted_iota(jnp.int32, (block_rows, 1), 0) + base
    return rows < n_valid


def _write_partial(out_ref, partial):
    # Lane-dense (8,128) output tile per block; scalar partial lives at [0,0].
    r = lax.broadcasted_iota(jnp.int32, (8, 128), 0)
    c = lax.broadcasted_iota(jnp.int32, (8, 128), 1)
    out_ref[0, :, :] = jnp.where((r == 0) & (c == 0), partial, 0.0)


def _hard_target_kernel(x_ref, tgt_ref, out_ref, *, confidence, smoothing,
                        n_valid, block_rows):
    # x_ref: (TN, C) logits (native dtype) ; tgt_ref: (TN, 1) int32
    x = x_ref[...].astype(jnp.float32)
    tgt = tgt_ref[...]                                    # (TN, 1)
    tn, c = x.shape

    m = jnp.max(x, axis=-1, keepdims=True)                                # (TN,1)
    lse = jnp.log(jnp.sum(jnp.exp(x - m), axis=-1, keepdims=True))        # (TN,1)
    sum_x = jnp.sum(x, axis=-1, keepdims=True)                            # (TN,1)
    cls = lax.broadcasted_iota(jnp.int32, (tn, c), 1)
    x_tgt = jnp.sum(jnp.where(cls == tgt, x, 0.0), axis=-1, keepdims=True)

    mlse = m + lse
    nll = mlse - x_tgt                       # -logprob[target]
    smooth = mlse - sum_x * (1.0 / c)        # -mean(logprobs)
    per_row = confidence * nll + smoothing * smooth

    valid = _row_mask(block_rows, n_valid)
    partial = jnp.sum(jnp.where(valid, per_row, 0.0))
    _write_partial(out_ref, partial)


def _soft_target_kernel(x_ref, tgt_ref, out_ref, *, n_valid, block_rows):
    # x_ref, tgt_ref: (TN, C) native dtype
    x = x_ref[...].astype(jnp.float32)
    t = tgt_ref[...].astype(jnp.float32)

    m = jnp.max(x, axis=-1, keepdims=True)
    lse = jnp.log(jnp.sum(jnp.exp(x - m), axis=-1, keepdims=True))
    sum_t = jnp.sum(t, axis=-1, keepdims=True)
    sum_tx = jnp.sum(t * x, axis=-1, keepdims=True)

    # sum(-t * logprobs) = (m + lse) * sum(t) - sum(t * x)
    per_row = (m + lse) * sum_t - sum_tx

    valid = _row_mask(block_rows, n_valid)
    partial = jnp.sum(jnp.where(valid, per_row, 0.0))
    _write_partial(out_ref, partial)


def label_smoothing_cross_entropy(x, target, smoothing=0.1, block_rows=512):
    """Matches LabelSmoothingCrossEntropy.forward (both target conventions)."""
    assert smoothing < 1.0
    confidence = 1.0 - smoothing
    c = x.shape[-1]
    x2 = x.reshape(-1, c)                 # keep native dtype; cast in-kernel
    n = x2.shape[0]
    soft = target.shape == x.shape

    n_streams = 2 if soft else 1
    tn = _choose_block_rows(n, c, x2.dtype.itemsize, n_streams, block_rows)
    n_pad = _round_up(n, tn)
    num_blocks = n_pad // tn
    if n_pad != n:
        x2 = jnp.pad(x2, ((0, n_pad - n), (0, 0)))

    if soft:
        t2 = target.reshape(-1, c)
        if n_pad != n:
            t2 = jnp.pad(t2, ((0, n_pad - n), (0, 0)))
        kernel = functools.partial(_soft_target_kernel,
                                   n_valid=n, block_rows=tn)
        in_specs = [
            pl.BlockSpec((tn, c), lambda i: (i, 0)),
            pl.BlockSpec((tn, c), lambda i: (i, 0)),
        ]
        args = (x2, t2)
    else:
        t2 = target.reshape(-1, 1).astype(jnp.int32)
        if n_pad != n:
            t2 = jnp.pad(t2, ((0, n_pad - n), (0, 0)))
        kernel = functools.partial(_hard_target_kernel,
                                   confidence=confidence, smoothing=smoothing,
                                   n_valid=n, block_rows=tn)
        in_specs = [
            pl.BlockSpec((tn, c), lambda i: (i, 0)),
            pl.BlockSpec((tn, 1), lambda i: (i, 0)),
        ]
        args = (x2, t2)

    partials = pl.pallas_call(
        kernel,
        out_shape=jax.ShapeDtypeStruct((num_blocks, 8, 128), jnp.float32),
        grid=(num_blocks,),
        in_specs=in_specs,
        out_specs=pl.BlockSpec((1, 8, 128), lambda i: (i, 0, 0)),
        compiler_params=pltpu.CompilerParams(
            dimension_semantics=("parallel",)),
    )(*args)

    return jnp.sum(partials) / n


def _reference(x, target, smoothing=0.1):
    # Pure-JAX reference mirroring the PyTorch forward exactly.
    confidence = 1.0 - smoothing
    lp = jax.nn.log_softmax(x.astype(jnp.float32), axis=-1)
    if target.shape == x.shape:
        return jnp.mean(jnp.sum(-target.astype(jnp.float32) * lp, axis=-1))
    nll = -jnp.take_along_axis(lp, target[..., None].astype(jnp.int32), axis=-1)[..., 0]
    smooth = -jnp.mean(lp, axis=-1)
    return jnp.mean(confidence * nll + smoothing * smooth)


if __name__ == "__main__":
    key = jax.random.PRNGKey(0)
    kx, kt, ks, kx2 = jax.random.split(key, 4)

    C = 128

    # Case 1: hard labels, N not a multiple of the row tile (exercises masking).
    N = 10
    x = jax.random.normal(kx, (N, C), dtype=jnp.float32)
    target = jax.random.randint(kt, (N,), 0, C, dtype=jnp.int32)
    loss_hard = jax.block_until_ready(label_smoothing_cross_entropy(x, target, 0.1))
    ref_hard = _reference(x, target, 0.1)
    assert jnp.allclose(loss_hard, ref_hard, atol=1e-4, rtol=1e-4), (loss_hard, ref_hard)

    # Case 2: soft labels, bf16 logits, multiple row blocks (block_rows=16 -> 3 steps).
    N2 = 40
    x_soft = jax.random.normal(kx2, (N2, C), dtype=jnp.bfloat16)
    soft_target = jax.nn.softmax(jax.random.normal(ks, (N2, C), dtype=jnp.float32), axis=-1)
    loss_soft = jax.block_until_ready(
        label_smoothing_cross_entropy(x_soft, soft_target, 0.1, block_rows=16))
    ref_soft = _reference(x_soft, soft_target, 0.1)
    assert jnp.allclose(loss_soft, ref_soft, atol=1e-3, rtol=1e-3), (loss_soft, ref_soft)

    print("KERNEL_OK")
</pallas_src>

<mosaic_0001>
module attributes {stable_mosaic.version = 11 : i64} {
  func.func @_hard_target_kernel(%arg0: i32, %arg1: memref<16x128xf32, #tpu.memory_space<vmem>>, %arg2: memref<16x1xi32, #tpu.memory_space<vmem>>, %arg3: memref<1x8x128xf32, #tpu.memory_space<vmem>>) attributes {dimension_semantics = [#tpu.dimension_semantics<parallel>], iteration_bounds = array<i64: 1>, scalar_prefetch = 0 : i64, scratch_operands = 0 : i64, tpu.core_type = #tpu.core_type<tc>, window_params = [{transform_indices = @transform_0, window_bounds = array<i64: 16, 128>}, {transform_indices = @transform_1, window_bounds = array<i64: 16, 1>}, {transform_indices = @transform_2, window_bounds = array<i64: 1, 8, 128>}]} {
    %c0 = arith.constant 0 : index
    %c0_0 = arith.constant 0 : index
    %0 = vector.load %arg1[%c0, %c0_0] : memref<16x128xf32, #tpu.memory_space<vmem>>, vector<16x128xf32>
    %c0_1 = arith.constant 0 : index
    %c0_2 = arith.constant 0 : index
    %1 = vector.load %arg2[%c0_1, %c0_2] : memref<16x1xi32, #tpu.memory_space<vmem>>, vector<16x1xi32>
    %cst = arith.constant dense<0xFF800000> : vector<16xf32>
    %2 = vector.multi_reduction <maximumf>, %0, %cst [1] : vector<16x128xf32> to vector<16xf32>
    %3 = vector.shape_cast %2 : vector<16xf32> to vector<16x1xf32>
    %4 = vector.broadcast %3 : vector<16x1xf32> to vector<16x128xf32>
    %5 = arith.subf %0, %4 : vector<16x128xf32>
    %6 = math.exp %5 : vector<16x128xf32>
    %cst_3 = arith.constant dense<0.000000e+00> : vector<16xf32>
    %7 = vector.multi_reduction <add>, %6, %cst_3 [1] : vector<16x128xf32> to vector<16xf32>
    %8 = vector.shape_cast %7 : vector<16xf32> to vector<16x1xf32>
    %9 = math.log %8 : vector<16x1xf32>
    %cst_4 = arith.constant dense<0.000000e+00> : vector<16xf32>
    %10 = vector.multi_reduction <add>, %0, %cst_4 [1] : vector<16x128xf32> to vector<16xf32>
    %11 = vector.shape_cast %10 : vector<16xf32> to vector<16x1xf32>
    %12 = tpu.iota {dimensions = array<i32: 1>} : vector<16x128xi32>
    %13 = vector.broadcast %1 : vector<16x1xi32> to vector<16x128xi32>
    %14 = arith.cmpi eq, %12, %13 : vector<16x128xi32>
    %cst_5 = arith.constant 0.000000e+00 : f32
    %15 = vector.broadcast %cst_5 : f32 to vector<16x128xf32>
    %16 = arith.select %14, %0, %15 : vector<16x128xi1>, vector<16x128xf32>
    %cst_6 = arith.constant dense<0.000000e+00> : vector<16xf32>
    %17 = vector.multi_reduction <add>, %16, %cst_6 [1] : vector<16x128xf32> to vector<16xf32>
    %18 = vector.shape_cast %17 : vector<16xf32> to vector<16x1xf32>
    %19 = arith.addf %3, %9 : vector<16x1xf32>
    %20 = arith.subf %19, %18 : vector<16x1xf32>
    %cst_7 = arith.constant 7.812500e-03 : f32
    %21 = vector.broadcast %cst_7 : f32 to vector<16x1xf32>
    %22 = arith.mulf %11, %21 : vector<16x1xf32>
    %23 = arith.subf %19, %22 : vector<16x1xf32>
    %cst_8 = arith.constant 0.899999976 : f32
    %24 = vector.broadcast %cst_8 : f32 to vector<16x1xf32>
    %25 = arith.mulf %24, %20 : vector<16x1xf32>
    %cst_9 = arith.constant 1.000000e-01 : f32
    %26 = vector.broadcast %cst_9 : f32 to vector<16x1xf32>
    %27 = arith.mulf %26, %23 : vector<16x1xf32>
    %28 = arith.addf %25, %27 : vector<16x1xf32>
    %c16_i32 = arith.constant 16 : i32
    %29 = arith.muli %arg0, %c16_i32 : i32
    %30 = tpu.iota {dimensions = array<i32: 0>} : vector<16x1xi32>
    %31 = vector.broadcast %29 : i32 to vector<16x1xi32>
    %32 = arith.addi %30, %31 : vector<16x1xi32>
    %c10_i32 = arith.constant 10 : i32
    %33 = vector.broadcast %c10_i32 : i32 to vector<16x1xi32>
    %34 = arith.cmpi slt, %32, %33 : vector<16x1xi32>
    %cst_10 = arith.constant 0.000000e+00 : f32
    %35 = vector.broadcast %cst_10 : f32 to vector<16x1xf32>
    %36 = arith.select %34, %28, %35 : vector<16x1xi1>, vector<16x1xf32>
    %37 = vector.shape_cast %36 : vector<16x1xf32> to vector<1x16x1xf32>
    %cst_11 = arith.constant dense<0.000000e+00> : vector<1xf32>
    %38 = vector.multi_reduction <add>, %37, %cst_11 [1, 2] : vector<1x16x1xf32> to vector<1xf32>
    %39 = vector.shape_cast %38 : vector<1xf32> to vector<1x1x1xf32>
    %40 = vector.extract %39[0, 0, 0] : f32 from vector<1x1x1xf32>
    %41 = tpu.iota {dimensions = array<i32: 0>} : vector<8x128xi32>
    %42 = tpu.iota {dimensions = array<i32: 1>} : vector<8x128xi32>
    %c0_i32 = arith.constant 0 : i32
    %43 = vector.broadcast %c0_i32 : i32 to vector<8x128xi32>
    %44 = arith.cmpi eq, %41, %43 : vector<8x128xi32>
    %c0_i32_12 = arith.constant 0 : i32
    %45 = vector.broadcast %c0_i32_12 : i32 to vector<8x128xi32>
    %46 = arith.cmpi eq, %42, %45 : vector<8x128xi32>
    %47 = arith.andi %44, %46 : vector<8x128xi1>
    %cst_13 = arith.constant 0.000000e+00 : f32
    %48 = vector.broadcast %40 : f32 to vector<8x128xf32>
    %49 = vector.broadcast %cst_13 : f32 to vector<8x128xf32>
    %50 = arith.select %47, %48, %49 : vector<8x128xi1>, vector<8x128xf32>
    %c0_14 = arith.constant 0 : index
    %c0_15 = arith.constant 0 : index
    %c0_16 = arith.constant 0 : index
    %51 = vector.load %arg3[%c0_14, %c0_15, %c0_16] : memref<1x8x128xf32, #tpu.memory_space<vmem>>, vector<1x8x128xf32>
    %52 = vector.shape_cast %51 : vector<1x8x128xf32> to vector<8x128xf32>
    %53 = vector.shape_cast %50 : vector<8x128xf32> to vector<1x8x128xf32>
    tpu.vector_store %arg3[%c0_14, %c0_15, %c0_16], %53 {strides = array<i32>} : memref<1x8x128xf32, #tpu.memory_space<vmem>>, vector<1x8x128xf32>,
    return
  }
  func.func @transform_0(%arg0: i32) -> (i32, i32) {
    %c0_i32 = arith.constant 0 : i32
    %c0_i32_0 = arith.constant 0 : i32
    return %arg0, %c0_i32 : i32, i32
  }
  func.func @transform_1(%arg0: i32) -> (i32, i32) {
    %c0_i32 = arith.constant 0 : i32
    %c0_i32_0 = arith.constant 0 : i32
    return %arg0, %c0_i32 : i32, i32
  }
  func.func @transform_2(%arg0: i32) -> (i32, i32, i32) {
    %c0_i32 = arith.constant 0 : i32
    %c0_i32_0 = arith.constant 0 : i32
    %c0_i32_1 = arith.constant 0 : i32
    return %arg0, %c0_i32, %c0_i32_0 : i32, i32, i32
  }
}

</mosaic_0001>

<llo_original>
// kernel: tpu_custom_call.1
$region0: #{tpu_custom_call.1}
  #allocation0 [shape = 'u32[]', space=smem, size = 0x4, offset = 0x4, fixed_abs, tag = 'smem constant byte address 0x4 - core index']
  #allocation1 [shape = 'u32[144,128]{1,0:T(1,128)}', space=vmem, size = 0x12000, scoped, tag = 'internal scratch']
  %s0 = inlined_call_operand.vmem [shape: f32[16,128], index: 0, kind: input, shape index: {}]
  %s1 = inlined_call_operand.vmem [shape: s32[16,1], index: 1, kind: input, shape index: {}]
  %s2 = inlined_call_operand.hbm [shape: f32[1,8,128], index: 2, kind: output, shape index: {}]
  %s3 = sld [smem:[#allocation0]]
  $region18: #{tpu_custom_call.1} parent=0
    _
  %s5 = ssub.s32 1, %s3
  %s6 = scalar_select 0, %s5, %s3
  $region1: #{tpu_custom_call.1} parent=0
    #allocation2 [shape = 'u8[4096]{0}', space=vmem, size = 0x1000, scoped, tag = 'output window, operand 0, single buffered']
    #allocation3 [shape = 's32[1]{0}', space=sflag, size = 0x4, scoped, tag = 'scoped memory for tpu_custom_call.1']
    %7 = vsyncpa [#allocation3], 0
    // Predicated region
    $region2: #{tpu_custom_call.1} parent=1 // pred_check
      _
    $region3: #{tpu_custom_call.1} parent=1 // pred_check_branch
      %9 = sbr.rel (0) target = $region5
    $region4: #{tpu_custom_call.1} parent=1 // pred_region
      _
    $region5: #{tpu_custom_call.1} parent=1 // pred_fallthru
      _
    // Predicated region
    $region6: #{tpu_custom_call.1} parent=1 // pred_check
      _
    $region7: #{tpu_custom_call.1} parent=1 // pred_check_branch
      %11 = sbr.rel (0) target = $region9
    $region8: #{tpu_custom_call.1} parent=1 // pred_region
      _
    $region9: #{tpu_custom_call.1} parent=1 // pred_fallthru
      _
    %v12 = vld [vmem:[%s0] sm:$0xff]
    %v13 = vld [vmem:[%s0 + $0x8] sm:$0xff]
    %v14 = vld [vmem:[%s1] sm:$0xff]
    %v15 = vld [vmem:[%s1 + $0x8] sm:$0xff]
    %16 = vmax.xlane.f32.xlu0 %v12
    %v17 = vpop.xlane.xlu0 %16
    %18 = vmax.xlane.f32.xlu0 %v13
    %v19 = vpop.xlane.xlu0 %18
    %v20 = vsub.f32 %v12, %v17
    %v21 = vsub.f32 %v13, %v19
    %v22 = vmul.f32 %v20, 1.442695
    %v23 = vpow.pop %v22
    %v24 = vmul.f32 %v21, 1.442695
    %v25 = vpow.pop %v24
    %26 = vadd.xlane.f32.xlu0 %v23
    %v27 = vpop.xlane.xlu0 %26
    %28 = vadd.xlane.f32.xlu0 %v25
    %v29 = vpop.xlane.xlu0 %28
    %v30 = vlog2.pop %v27
    %v31 = vmul.f32 %v30, 0.6931472
    %v32 = vlog2.pop %v29
    %v33 = vmul.f32 %v32, 0.6931472
    %34 = vadd.xlane.f32.xlu0 %v12
    %v35 = vpop.xlane.xlu0 %34
    %36 = vadd.xlane.f32.xlu0 %v13
    %v37 = vpop.xlane.xlu0 %36
    %v38 = vlaneseq
    %v39 = vand.u32 %v38, 127
    %40 = vset.pattern.permute.xlu0 0
    %41 = vperm.xlu0 %40, %v14
    %v42 = vpop.permute.xlu0 %41
    %43 = vset.pattern.permute.xlu0 0
    %44 = vperm.xlu0 %43, %v15
    %v45 = vpop.permute.xlu0 %44
    %vm46 = vcmp.eq.s32.totalorder %v39, %v42
    %vm47 = vcmp.eq.s32.totalorder %v39, %v45
    %v48 = vsel %vm46, %v12, 0.0
    %v49 = vsel %vm47, %v13, 0.0
    %50 = vadd.xlane.f32.xlu0 %v48
    %v51 = vpop.xlane.xlu0 %50
    %52 = vadd.xlane.f32.xlu0 %v49
    %v53 = vpop.xlane.xlu0 %52
    %v54 = vadd.f32 %v17, %v31
    %v55 = vadd.f32 %v19, %v33
    %v56 = vsub.f32 %v54, %v51
    %v57 = vsub.f32 %v55, %v53
    %v58 = vmul.f32 %v35, 0.0078125
    %v59 = vmul.f32 %v37, 0.0078125
    %v60 = vsub.f32 %v54, %v58
    %v61 = vsub.f32 %v55, %v59
    %v62 = vmul.f32 %v56, 0.9
    %v63 = vmul.f32 %v57, 0.9
    %v64 = vmul.f32 %v60, 0.1
    %v65 = vmul.f32 %v61, 0.1
    %v66 = vadd.f32 %v62, %v64
    %v67 = vadd.f32 %v63, %v65
    %s68 = smul.u32 0, 16
    %v69 = vlaneseq
    %v70 = vshrl.u32 %v69, 7
    %v71 = vadd.s32 %v70, 8
    %v72 = vstv %s68
    %v73 = vadd.s32 %v70, %v72
    %v74 = vadd.s32 %v71, %v72
    %vm75 = vcmp.lt.s32.totalorder %v73, 10
    %vm76 = vcmp.lt.s32.totalorder %v74, 10
    %v77 = vsel %vm75, %v66, 0.0
    %v78 = vsel %vm76, %v67, 0.0
    %vm79 = vcmask 7168
    %v80 = vsel %vm79, %v77, 0.0
    %v81 = vsel %vm79, %v78, 0.0
    %v82 = vadd.f32 %v80, %v81
    %83 = vadd.xlane.f32.xlu0 %v82
    %v84 = vpop.xlane.xlu0 %83
    %v85 = vrot.slane %v84, 4
    %v86 = vadd.f32 %v84, %v85
    %v87 = vrot.slane %v86, 2
    %v88 = vadd.f32 %v86, %v87
    %v89 = vrot.slane %v88, 1
    %v90 = vadd.f32 %v88, %v89
    %s91 = vtos %v90
    %vm92 = vcmp.eq.s32.totalorder %v70, 0
    %vm93 = vcmp.eq.s32.totalorder %v39, 0
    %vm94 = vmand %vm92, %vm93
    %v95 = vstv %s91
    %v96 = vsel %vm94, %v95, 0.0
    %97 = vst [vmem:[#allocation2] sm:$0xff] %v96
    // Predicated region
    $region10: #{tpu_custom_call.1} parent=1 // pred_check
      _
    $region11: #{tpu_custom_call.1} parent=1 // pred_check_branch
      %99 = sbr.rel (0) target = $region13
    $region12: #{tpu_custom_call.1} parent=1 // pred_region
      %s101 = ssub.s32 128, 128
      %102 = vsyncadd [#allocation3], %s101
      %s104 = sshll.u32 [#allocation2], 4
      %s105 = int_to_ptr.vmem [resolvable:$true] %s104
      %107 = dma.vmem_to_hbm [thread:$0]  %s105, 128, %s2, [#allocation3]
    $region13: #{tpu_custom_call.1} parent=1 // pred_fallthru
      _
    // Predicated region
    $region14: #{tpu_custom_call.1} parent=1 // pred_check
      _
    $region15: #{tpu_custom_call.1} parent=1 // pred_check_branch
      %109 = sbr.rel (0) target = $region17
    $region16: #{tpu_custom_call.1} parent=1 // pred_region
      %110 = dma.done [#allocation3], 128
    $region17: #{tpu_custom_call.1} parent=1 // pred_fallthru
      _
    %111 = vsyncpa [#allocation3], 1

</llo_original>
